<compile_context>
chip_gen: v5e
topology: v5e:2x2
jax: 0.10.0
libtpu: 0.0.40
codegen_flags: <defaults>
</compile_context>

<pallas_src>
import functools

import jax
import jax.numpy as jnp
from jax.experimental import pallas as pl
from jax.experimental.pallas import tpu as pltpu

LANE = 128


def _round_up(x, m):
    return ((x + m - 1) // m) * m


def _vmem_capacity_bytes():
    try:
        info = pltpu.get_tpu_info()
        for attr in ("vmem_capacity_bytes", "vmem_size_bytes", "vmem_bytes"):
            v = getattr(info, attr, None)
            if v:
                return int(v)
    except Exception:
        pass
    return 64 * 1024 * 1024  # conservative (v7x-sized) fallback


def _vmem_limit_bytes():
    # Scoped-VMEM limit handed to the compiler: most of physical VMEM, capped
    # (~48 MiB on v7x, ~96 MiB on v5e/v6e).
    return min(int(_vmem_capacity_bytes() * 0.75), 100 * 1024 * 1024)


def _pick_tiles(n_pad, *, a_itemsize, x_width, x_itemsize, out_width,
                out_itemsize, const_bytes, budget):
    """Largest (tm, tk) whose double-buffered working set fits `budget`."""

    def step_bytes(tm, tk):
        return (2 * tm * tk * a_itemsize             # adjacency tile (dbl-buf)
                + 2 * tk * x_width * x_itemsize      # feature tile
                + 2 * (tk + tm) * 4                  # d^{-1/2} tiles
                + tm * x_width * 4                   # f32 accumulator scratch
                + 2 * tm * out_width * out_itemsize  # output tile
                + const_bytes)                       # weights / biases

    tm_c = [c for c in (1024, 512, 256, 128) if c <= n_pad and n_pad % c == 0]
    tk_c = [c for c in (2048, 1024, 512, 256, 128)
            if c <= n_pad and n_pad % c == 0]
    # Keep >= 2 row blocks so the "parallel" axis can shard across v7x's 2 TCs.
    if n_pad >= 2 * LANE:
        tm_c = [c for c in tm_c if n_pad // c >= 2] or tm_c
    tm_min, tk_min = min(tm_c), min(tk_c)
    # Grow tk first (longer contiguous DMA rows of the row-major adjacency)...
    tk = max([c for c in tk_c if step_bytes(tm_min, c) <= budget] or [tk_min])
    # ...then tm (cuts feature re-fetch traffic and per-step overhead).
    tm = max([c for c in tm_c if step_bytes(c, tk) <= budget] or [tm_min])
    return tm, tk


# ----------------------------------------------------------------------------
# Fused layer-1 kernel:
#   acc (f32)  += A_tile @ (d_in * X_tile)                 (k loop)
#   finalize:     h1 = relu(d_out * acc [@ W1] + b1)
#                 Z  = (d_out * h1) @ W2                   (layer-2 src scale +
#                                                           W2 fused here)
# ----------------------------------------------------------------------------
def _layer1_kernel(a_ref, x_ref, din_ref, dout_ref, b1_ref, *rest,
                   use_w1, compute_dtype):
    if use_w1:
        w1_ref, w2_ref, o_ref, acc_ref = rest
    else:
        w2_ref, o_ref, acc_ref = rest

    k = pl.program_id(1)

    @pl.when(k == 0)
    def _():
        acc_ref[...] = jnp.zeros_like(acc_ref)

    a = a_ref[...].astype(compute_dtype)                       # int8 -> cd
    xs = (din_ref[...] * x_ref[...].astype(jnp.float32)).astype(compute_dtype)
    acc_ref[...] += jnp.dot(a, xs, preferred_element_type=jnp.float32)

    @pl.when(k == pl.num_programs(1) - 1)
    def _():
        dout = dout_ref[...]
        y = dout * acc_ref[...]                                # layer-1 dest scale
        if use_w1:
            y = jnp.dot(y.astype(compute_dtype),
                        w1_ref[...].astype(compute_dtype),
                        preferred_element_type=jnp.float32)
        h1 = jnp.maximum(y + b1_ref[...], 0.0)                 # relu(ÂXW1 + b1)
        z = jnp.dot((dout * h1).astype(compute_dtype),         # layer-2 src scale
                    w2_ref[...].astype(compute_dtype),         # fused W2
                    preferred_element_type=jnp.float32)
        o_ref[...] = z.astype(o_ref.dtype)


def _layer1(a_pad, x_pad, d_pad, w1, b1, w2, *, use_w1, compute_dtype,
            vmem_limit):
    n_pad = a_pad.shape[0]
    f_x = x_pad.shape[1]
    f_hid = b1.shape[1]
    f_out = w2.shape[1]
    cd_size = jnp.dtype(compute_dtype).itemsize

    const_bytes = 2 * 4 * ((f_x * f_hid if use_w1 else 0)
                           + f_hid * f_out + f_hid)
    tm, tk = _pick_tiles(
        n_pad,
        a_itemsize=jnp.dtype(a_pad.dtype).itemsize,
        x_width=f_x, x_itemsize=cd_size,
        out_width=f_out, out_itemsize=cd_size,
        const_bytes=const_bytes,
        budget=int(vmem_limit * 0.85))

    in_specs = [
        pl.BlockSpec((tm, tk), lambda i, k: (i, k)),      # A tile
        pl.BlockSpec((tk, f_x), lambda i, k: (k, 0)),     # X tile (contraction)
        pl.BlockSpec((tk, 1), lambda i, k: (k, 0)),       # d^{-1/2} (source)
        pl.BlockSpec((tm, 1), lambda i, k: (i, 0)),       # d^{-1/2} (dest)
        pl.BlockSpec((1, f_hid), lambda i, k: (0, 0)),    # b1
    ]
    args = [a_pad, x_pad, d_pad, d_pad, b1]
    if use_w1:
        in_specs.append(pl.BlockSpec((f_x, f_hid), lambda i, k: (0, 0)))
        args.append(w1)
    in_specs.append(pl.BlockSpec((f_hid, f_out), lambda i, k: (0, 0)))
    args.append(w2)

    kernel = functools.partial(_layer1_kernel, use_w1=use_w1,
                               compute_dtype=compute_dtype)
    return pl.pallas_call(
        kernel,
        out_shape=jax.ShapeDtypeStruct((n_pad, f_out), compute_dtype),
        grid_spec=pltpu.PrefetchScalarGridSpec(
            num_scalar_prefetch=0,
            grid=(n_pad // tm, n_pad // tk),
            in_specs=in_specs,
            out_specs=pl.BlockSpec((tm, f_out), lambda i, k: (i, 0)),
            scratch_shapes=[pltpu.VMEM((tm, f_x), jnp.float32)]),
        compiler_params=pltpu.CompilerParams(
            dimension_semantics=("parallel", "arbitrary"),
            vmem_limit_bytes=vmem_limit),
    )(*args)


# ----------------------------------------------------------------------------
# Layer-2 kernel (pure aggregation): out = d_out * (A @ Z) + b2
# (Z already carries the source-side D^{-1/2} and the W2 transform.)
# ----------------------------------------------------------------------------
def _layer2_kernel(a_ref, z_ref, dout_ref, b2_ref, o_ref, acc_ref, *,
                   compute_dtype):
    k = pl.program_id(1)

    @pl.when(k == 0)
    def _():
        acc_ref[...] = jnp.zeros_like(acc_ref)

    a = a_ref[...].astype(compute_dtype)
    acc_ref[...] += jnp.dot(a, z_ref[...], preferred_element_type=jnp.float32)

    @pl.when(k == pl.num_programs(1) - 1)
    def _():
        o_ref[...] = (dout_ref[...] * acc_ref[...]
                      + b2_ref[...]).astype(o_ref.dtype)


def _layer2(a_pad, z_pad, d_pad, b2, *, compute_dtype, vmem_limit):
    n_pad = a_pad.shape[0]
    f_out = z_pad.shape[1]
    cd_size = jnp.dtype(compute_dtype).itemsize
    tm, tk = _pick_tiles(
        n_pad,
        a_itemsize=jnp.dtype(a_pad.dtype).itemsize,
        x_width=f_out, x_itemsize=cd_size,
        out_width=f_out, out_itemsize=4,
        const_bytes=2 * 4 * f_out,
        budget=int(vmem_limit * 0.85))

    kernel = functools.partial(_layer2_kernel, compute_dtype=compute_dtype)
    return pl.pallas_call(
        kernel,
        out_shape=jax.ShapeDtypeStruct((n_pad, f_out), jnp.float32),
        grid_spec=pltpu.PrefetchScalarGridSpec(
            num_scalar_prefetch=0,
            grid=(n_pad // tm, n_pad // tk),
            in_specs=[pl.BlockSpec((tm, tk), lambda i, k: (i, k)),
                      pl.BlockSpec((tk, f_out), lambda i, k: (k, 0)),
                      pl.BlockSpec((tm, 1), lambda i, k: (i, 0)),
                      pl.BlockSpec((1, f_out), lambda i, k: (0, 0))],
            out_specs=pl.BlockSpec((tm, f_out), lambda i, k: (i, 0)),
            scratch_shapes=[pltpu.VMEM((tm, f_out), jnp.float32)]),
        compiler_params=pltpu.CompilerParams(
            dimension_semantics=("parallel", "arbitrary"),
            vmem_limit_bytes=vmem_limit),
    )(a_pad, z_pad, d_pad, b2)


# ----------------------------------------------------------------------------
# Small dense transform kernel: Z0 = X @ W1 (used only when f_hid_p < f_in_p).
# ----------------------------------------------------------------------------
def _dense_kernel(x_ref, w_ref, o_ref):
    o_ref[...] = jnp.dot(x_ref[...], w_ref[...].astype(x_ref.dtype),
                         preferred_element_type=jnp.float32).astype(o_ref.dtype)


def _dense_transform(x_pad, w, *, compute_dtype, vmem_limit):
    n_pad, f_in = x_pad.shape
    f_out = w.shape[1]
    tm = max(c for c in (1024, 512, 256, 128) if c <= n_pad and n_pad % c == 0)
    return pl.pallas_call(
        _dense_kernel,
        out_shape=jax.ShapeDtypeStruct((n_pad, f_out), compute_dtype),
        grid_spec=pltpu.PrefetchScalarGridSpec(
            num_scalar_prefetch=0,
            grid=(n_pad // tm,),
            in_specs=[pl.BlockSpec((tm, f_in), lambda i: (i, 0)),
                      pl.BlockSpec((f_in, f_out), lambda i: (0, 0))],
            out_specs=pl.BlockSpec((tm, f_out), lambda i: (i, 0))),
        compiler_params=pltpu.CompilerParams(
            dimension_semantics=("parallel",),
            vmem_limit_bytes=vmem_limit),
    )(x_pad, w)


# ----------------------------------------------------------------------------
# Full forward pass.
# ----------------------------------------------------------------------------
def gcn_forward(a, features, params, compute_dtype=jnp.bfloat16,
                adj_is_binary=True):
    n = a.shape[0]
    f_in = features.shape[1]
    f_hid = params["w1"].shape[1]
    f_out = params["w2"].shape[1]

    n_pad = _round_up(n, LANE)
    f_in_p = _round_up(f_in, LANE)
    f_hid_p = _round_up(f_hid, LANE)
    f_out_p = _round_up(f_out, LANE)

    vmem_limit = _vmem_limit_bytes()

    # Symmetric-norm degrees (clamped).  Â itself is never materialized.
    deg = jnp.clip(a.sum(axis=1), 1.0, None)
    d_inv_sqrt = jax.lax.rsqrt(deg).astype(jnp.float32)
    d_pad = jnp.pad(d_inv_sqrt, (0, n_pad - n),
                    constant_values=1.0).reshape(n_pad, 1)

    # One shared adjacency copy: int8 for a 0/1 graph (upcast in-kernel),
    # otherwise compute_dtype.  Cast BEFORE padding: no padded f32 N^2 temp.
    adj_dtype = jnp.int8 if adj_is_binary else compute_dtype
    a_pad = jnp.pad(a.astype(adj_dtype), ((0, n_pad - n), (0, n_pad - n)))

    # Features streamed in compute dtype; accumulation stays f32 in-kernel.
    x = jnp.pad(features, ((0, n_pad - n),
                           (0, f_in_p - f_in))).astype(compute_dtype)

    w1 = jnp.pad(params["w1"].astype(jnp.float32),
                 ((0, f_in_p - f_in), (0, f_hid_p - f_hid)))
    b1 = jnp.pad(params["b1"].astype(jnp.float32).reshape(1, -1),
                 ((0, 0), (0, f_hid_p - f_hid)))
    w2 = jnp.pad(params["w2"].astype(jnp.float32),
                 ((0, f_hid_p - f_hid), (0, f_out_p - f_out)))
    b2 = jnp.pad(params["b2"].astype(jnp.float32).reshape(1, -1),
                 ((0, 0), (0, f_out_p - f_out)))

    # Layer-1 reassociation: if the hidden width is narrower than the input
    # width, transform X by W1 first so the N^2 aggregation contracts over the
    # smaller feature width.
    if f_hid_p < f_in_p:
        x_in = _dense_transform(x, w1, compute_dtype=compute_dtype,
                                vmem_limit=vmem_limit)
        use_w1 = False
    else:
        x_in = x
        use_w1 = True

    # Fused layer 1: Z = (D^{-1/2} relu(Â X W1 + b1)) W2  (H1 never hits HBM).
    z = _layer1(a_pad, x_in, d_pad, w1, b1, w2, use_w1=use_w1,
                compute_dtype=compute_dtype, vmem_limit=vmem_limit)
    # Layer 2 is a pure aggregation: OUT = D^{-1/2} (A Z) + b2.
    out = _layer2(a_pad, z, d_pad, b2, compute_dtype=compute_dtype,
                  vmem_limit=vmem_limit)
    return out[:n, :f_out]


def gcn_reference(a, features, params):
    # Pure-JAX f32 reference for correctness checks.
    deg = jnp.clip(a.sum(axis=1), 1.0, None)
    d_inv_sqrt = jax.lax.rsqrt(deg)
    a_hat = a * d_inv_sqrt[:, None] * d_inv_sqrt[None, :]
    h = jnp.maximum(a_hat @ features @ params["w1"] + params["b1"], 0.0)
    return a_hat @ h @ params["w2"] + params["b2"]


def init_params(key, input_dim, hidden_dim, output_dim, dtype=jnp.float32):
    # DGL GraphConv init: xavier_uniform weights, zero bias.
    k1, k2 = jax.random.split(key)

    def xavier(k, shape):
        fan_in, fan_out = shape
        limit = (6.0 / (fan_in + fan_out)) ** 0.5
        return jax.random.uniform(k, shape, dtype, -limit, limit)

    return {
        "w1": xavier(k1, (input_dim, hidden_dim)),
        "b1": jnp.zeros((1, hidden_dim), dtype),
        "w2": xavier(k2, (hidden_dim, output_dim)),
        "b2": jnp.zeros((1, output_dim), dtype),
    }


if __name__ == "__main__":
    key = jax.random.PRNGKey(0)
    n_nodes, input_dim, hidden_dim, output_dim = 16, 8, 32, 16
    k_adj, k_feat, k_param = jax.random.split(key, 3)

    # Deterministic small undirected graph with self-loops (dense adjacency).
    logits = jax.random.uniform(k_adj, (n_nodes, n_nodes))
    a = ((logits + logits.T) > 1.0).astype(jnp.float32)
    a = jnp.maximum(a, jnp.eye(n_nodes, dtype=jnp.float32))

    features = jax.random.normal(k_feat, (n_nodes, input_dim), jnp.float32)
    params = init_params(k_param, input_dim, hidden_dim, output_dim)

    ref = gcn_reference(a, features, params)

    # f32 compute path (exact) and bf16 streaming path (production default).
    out_f32 = jax.block_until_ready(
        gcn_forward(a, features, params, compute_dtype=jnp.float32))
    out_bf16 = jax.block_until_ready(
        gcn_forward(a, features, params, compute_dtype=jnp.bfloat16))

    assert out_bf16.shape == (n_nodes, output_dim)
    assert jnp.allclose(out_f32, ref, atol=1e-4, rtol=1e-4)
    assert jnp.allclose(out_bf16, ref, atol=5e-2, rtol=5e-2)
    print("KERNEL_OK")
</pallas_src>

<mosaic_0001>
module attributes {stable_mosaic.version = 11 : i64} {
  func.func @_layer1_kernel(%arg0: i32, %arg1: i32, %arg2: memref<128x128xi8, #tpu.memory_space<vmem>>, %arg3: memref<128x128xf32, #tpu.memory_space<vmem>>, %arg4: memref<128x1xf32, #tpu.memory_space<vmem>>, %arg5: memref<128x1xf32, #tpu.memory_space<vmem>>, %arg6: memref<1x128xf32, #tpu.memory_space<vmem>>, %arg7: memref<128x128xf32, #tpu.memory_space<vmem>>, %arg8: memref<128x128xf32, #tpu.memory_space<vmem>>, %arg9: memref<128x128xf32, #tpu.memory_space<vmem>>, %arg10: memref<128x128xf32, #tpu.memory_space<vmem>>) attributes {dimension_semantics = [#tpu.dimension_semantics<parallel>, #tpu.dimension_semantics<arbitrary>], iteration_bounds = array<i64: 1, 1>, scalar_prefetch = 0 : i64, scratch_operands = 1 : i64, tpu.core_type = #tpu.core_type<tc>, window_params = [{transform_indices = @transform_0, window_bounds = array<i64: 128, 128>}, {transform_indices = @transform_1, window_bounds = array<i64: 128, 128>}, {transform_indices = @transform_2, window_bounds = array<i64: 128, 1>}, {transform_indices = @transform_3, window_bounds = array<i64: 128, 1>}, {pipeline_mode = #tpu.pipeline_mode<synchronous>, transform_indices = @transform_4, window_bounds = array<i64: 1, 128>}, {pipeline_mode = #tpu.pipeline_mode<synchronous>, transform_indices = @transform_5, window_bounds = array<i64: 128, 128>}, {pipeline_mode = #tpu.pipeline_mode<synchronous>, transform_indices = @transform_6, window_bounds = array<i64: 128, 128>}, {transform_indices = @transform_7, window_bounds = array<i64: 128, 128>}]} {
    %c0_i32 = arith.constant 0 : i32
    %0 = arith.cmpi eq, %arg1, %c0_i32 : i32
    %1 = arith.extui %0 : i1 to i32
    %c0_i32_0 = arith.constant 0 : i32
    %2 = arith.cmpi ne, %1, %c0_i32_0 : i32
    scf.if %2 {
      %cst_12 = arith.constant 0.000000e+00 : f32
      %16 = vector.broadcast %cst_12 : f32 to vector<128x128xf32>
      %c0_13 = arith.constant 0 : index
      %c0_14 = arith.constant 0 : index
      %17 = vector.load %arg10[%c0_13, %c0_14] : memref<128x128xf32, #tpu.memory_space<vmem>>, vector<128x128xf32>
      tpu.vector_store %arg10[%c0_13, %c0_14], %16 {strides = array<i32>} : memref<128x128xf32, #tpu.memory_space<vmem>>, vector<128x128xf32>,
    } else {
    }
    %c0 = arith.constant 0 : index
    %c0_1 = arith.constant 0 : index
    %3 = vector.load %arg2[%c0, %c0_1] : memref<128x128xi8, #tpu.memory_space<vmem>>, vector<128x128xi8>
    %4 = arith.sitofp %3 : vector<128x128xi8> to vector<128x128xf32>
    %c0_2 = arith.constant 0 : index
    %c0_3 = arith.constant 0 : index
    %5 = vector.load %arg4[%c0_2, %c0_3] : memref<128x1xf32, #tpu.memory_space<vmem>>, vector<128x1xf32>
    %c0_4 = arith.constant 0 : index
    %c0_5 = arith.constant 0 : index
    %6 = vector.load %arg3[%c0_4, %c0_5] : memref<128x128xf32, #tpu.memory_space<vmem>>, vector<128x128xf32>
    %7 = vector.broadcast %5 : vector<128x1xf32> to vector<128x128xf32>
    %8 = arith.mulf %7, %6 : vector<128x128xf32>
    %c0_6 = arith.constant 0 : index
    %c0_7 = arith.constant 0 : index
    %9 = vector.load %arg10[%c0_6, %c0_7] : memref<128x128xf32, #tpu.memory_space<vmem>>, vector<128x128xf32>
    %cst = arith.constant dense<0.000000e+00> : vector<128x128xf32>
    %10 = tpu.matmul %4, %8, %cst {dimension_numbers = #tpu.dot_dimension_numbers<[1], [0], [0], [1], [0, 0, 1, 1], [], []>} : vector<128x128xf32>, vector<128x128xf32>, vector<128x128xf32> -> vector<128x128xf32>
    %11 = arith.addf %9, %10 : vector<128x128xf32>
    %c0_8 = arith.constant 0 : index
    %c0_9 = arith.constant 0 : index
    %12 = vector.load %arg10[%c0_8, %c0_9] : memref<128x128xf32, #tpu.memory_space<vmem>>, vector<128x128xf32>
    tpu.vector_store %arg10[%c0_8, %c0_9], %11 {strides = array<i32>} : memref<128x128xf32, #tpu.memory_space<vmem>>, vector<128x128xf32>,
    %c0_i32_10 = arith.constant 0 : i32
    %13 = arith.cmpi eq, %arg1, %c0_i32_10 : i32
    %14 = arith.extui %13 : i1 to i32
    %c0_i32_11 = arith.constant 0 : i32
    %15 = arith.cmpi ne, %14, %c0_i32_11 : i32
    scf.if %15 {
      %c0_12 = arith.constant 0 : index
      %c0_13 = arith.constant 0 : index
      %16 = vector.load %arg5[%c0_12, %c0_13] : memref<128x1xf32, #tpu.memory_space<vmem>>, vector<128x1xf32>
      %c0_14 = arith.constant 0 : index
      %c0_15 = arith.constant 0 : index
      %17 = vector.load %arg10[%c0_14, %c0_15] : memref<128x128xf32, #tpu.memory_space<vmem>>, vector<128x128xf32>
      %18 = vector.broadcast %16 : vector<128x1xf32> to vector<128x128xf32>
      %19 = arith.mulf %18, %17 : vector<128x128xf32>
      %c0_16 = arith.constant 0 : index
      %c0_17 = arith.constant 0 : index
      %20 = vector.load %arg7[%c0_16, %c0_17] : memref<128x128xf32, #tpu.memory_space<vmem>>, vector<128x128xf32>
      %cst_18 = arith.constant dense<0.000000e+00> : vector<128x128xf32>
      %21 = tpu.matmul %19, %20, %cst_18 {dimension_numbers = #tpu.dot_dimension_numbers<[1], [0], [0], [1], [0, 0, 1, 1], [], []>} : vector<128x128xf32>, vector<128x128xf32>, vector<128x128xf32> -> vector<128x128xf32>
      %c0_19 = arith.constant 0 : index
      %c0_20 = arith.constant 0 : index
      %22 = vector.load %arg6[%c0_19, %c0_20] : memref<1x128xf32, #tpu.memory_space<vmem>>, vector<1x128xf32>
      %23 = vector.broadcast %22 : vector<1x128xf32> to vector<128x128xf32>
      %24 = arith.addf %21, %23 : vector<128x128xf32>
      %cst_21 = arith.constant 0.000000e+00 : f32
      %25 = vector.broadcast %cst_21 : f32 to vector<128x128xf32>
      %26 = arith.maximumf %24, %25 : vector<128x128xf32>
      %27 = vector.broadcast %16 : vector<128x1xf32> to vector<128x128xf32>
      %28 = arith.mulf %27, %26 : vector<128x128xf32>
      %c0_22 = arith.constant 0 : index
      %c0_23 = arith.constant 0 : index
      %29 = vector.load %arg8[%c0_22, %c0_23] : memref<128x128xf32, #tpu.memory_space<vmem>>, vector<128x128xf32>
      %cst_24 = arith.constant dense<0.000000e+00> : vector<128x128xf32>
      %30 = tpu.matmul %28, %29, %cst_24 {dimension_numbers = #tpu.dot_dimension_numbers<[1], [0], [0], [1], [0, 0, 1, 1], [], []>} : vector<128x128xf32>, vector<128x128xf32>, vector<128x128xf32> -> vector<128x128xf32>
      %c0_25 = arith.constant 0 : index
      %c0_26 = arith.constant 0 : index
      %31 = vector.load %arg9[%c0_25, %c0_26] : memref<128x128xf32, #tpu.memory_space<vmem>>, vector<128x128xf32>
      tpu.vector_store %arg9[%c0_25, %c0_26], %30 {strides = array<i32>} : memref<128x128xf32, #tpu.memory_space<vmem>>, vector<128x128xf32>,
    } else {
    }
    return
  }
  func.func @transform_0(%arg0: i32, %arg1: i32) -> (i32, i32) {
    %c0_i32 = arith.constant 0 : i32
    return %arg0, %arg1 : i32, i32
  }
  func.func @transform_1(%arg0: i32, %arg1: i32) -> (i32, i32) {
    %c0_i32 = arith.constant 0 : i32
    %c0_i32_0 = arith.constant 0 : i32
    return %arg1, %c0_i32 : i32, i32
  }
  func.func @transform_2(%arg0: i32, %arg1: i32) -> (i32, i32) {
    %c0_i32 = arith.constant 0 : i32
    %c0_i32_0 = arith.constant 0 : i32
    return %arg1, %c0_i32 : i32, i32
  }
  func.func @transform_3(%arg0: i32, %arg1: i32) -> (i32, i32) {
    %c0_i32 = arith.constant 0 : i32
    %c0_i32_0 = arith.constant 0 : i32
    return %arg0, %c0_i32 : i32, i32
  }
  func.func @transform_4(%arg0: i32, %arg1: i32) -> (i32, i32) {
    %c0_i32 = arith.constant 0 : i32
    %c0_i32_0 = arith.constant 0 : i32
    %c0_i32_1 = arith.constant 0 : i32
    return %c0_i32, %c0_i32_0 : i32, i32
  }
  func.func @transform_5(%arg0: i32, %arg1: i32) -> (i32, i32) {
    %c0_i32 = arith.constant 0 : i32
    %c0_i32_0 = arith.constant 0 : i32
    %c0_i32_1 = arith.constant 0 : i32
    return %c0_i32, %c0_i32_0 : i32, i32
  }
  func.func @transform_6(%arg0: i32, %arg1: i32) -> (i32, i32) {
    %c0_i32 = arith.constant 0 : i32
    %c0_i32_0 = arith.constant 0 : i32
    %c0_i32_1 = arith.constant 0 : i32
    return %c0_i32, %c0_i32_0 : i32, i32
  }
  func.func @transform_7(%arg0: i32, %arg1: i32) -> (i32, i32) {
    %c0_i32 = arith.constant 0 : i32
    %c0_i32_0 = arith.constant 0 : i32
    return %arg0, %c0_i32 : i32, i32
  }
}

</mosaic_0001>

<llo_original>
// kernel: tpu_custom_call.1
$region0: #{tpu_custom_call.1}
  #allocation0 [shape = 'u32[]', space=smem, size = 0x4, offset = 0x4, fixed_abs, tag = 'smem constant byte address 0x4 - core index']
  #allocation1 [shape = 'u32[72,128]{1,0:T(1,128)}', space=vmem, size = 0x9000, scoped, tag = 'internal scratch']
  #allocation2 [shape = 'f32[128,128]{1,0:T(8,128)}', space=vmem, size = 0x10000, scoped, tag = 'scratch operand']
  %s0 = inlined_call_operand.hbm [shape: s8[128,128], index: 0, kind: input, shape index: {}]
  %s1 = inlined_call_operand.vmem [shape: f32[128,128], index: 1, kind: input, shape index: {}]
  %s2 = inlined_call_operand.vmem [shape: f32[128,1], index: 2, kind: input, shape index: {}]
  %s3 = inlined_call_operand.vmem [shape: f32[128,1], index: 3, kind: input, shape index: {}]
  %s4 = inlined_call_operand.vmem [shape: f32[1,128], index: 4, kind: input, shape index: {}]
  %s5 = inlined_call_operand.vmem [shape: f32[128,128], index: 5, kind: input, shape index: {}]
  %s6 = inlined_call_operand.hbm [shape: f32[128,128], index: 6, kind: input, shape index: {}]
  %s7 = inlined_call_operand.hbm [shape: f32[128,128], index: 7, kind: output, shape index: {}]
  %s8 = sld [smem:[#allocation0]]
  $region54: #{tpu_custom_call.1} parent=0
    _
  %s10 = ssub.s32 1, %s8
  %s11 = scalar_select 0, %s10, %s8
  $region1: #{tpu_custom_call.1} parent=0
    #allocation3 [shape = 'u8[16384]{0}', space=vmem, size = 0x4000, scoped, tag = 'input window, operand 0, single buffered']
    #allocation4 [shape = 's32[1]{0}', space=sflag, size = 0x4, scoped, tag = 'scoped memory for tpu_custom_call.1']
    #allocation5 [shape = 's32[1]{0}', space=sflag, size = 0x4, scoped, tag = 'scoped memory for tpu_custom_call.1']
    #allocation6 [shape = 'u8[65536]{0}', space=vmem, size = 0x10000, scoped, tag = 'input window, operand 6, single buffered']
    #allocation7 [shape = 's32[1]{0}', space=sflag, size = 0x4, scoped, tag = 'scoped memory for tpu_custom_call.1']
    #allocation8 [shape = 'u8[65536]{0}', space=vmem, size = 0x10000, scoped, tag = 'output window, operand 0, single buffered']
    %12 = vsyncpa [#allocation4], 0
    %13 = vsyncpa [#allocation7], 0
    %14 = vsyncpa [#allocation5], 0
    // Predicated region
    $region2: #{tpu_custom_call.1} parent=1 // pred_check
      _
    $region3: #{tpu_custom_call.1} parent=1 // pred_check_branch
      %16 = sbr.rel (0) target = $region5
    $region4: #{tpu_custom_call.1} parent=1 // pred_region
      %18 = vsyncadd [#allocation4], 0
      %s19 = sshll.u32 %s0, 4
      %s20 = int_to_ptr.hbm [resolvable:$true] %s19
      %s21 = sshll.u32 [#allocation3], 4
      %s22 = int_to_ptr.vmem [resolvable:$true] %s21
      %27 = dma.hbm_to_vmem [thread:$0]  %s20, 512, %s22, [#allocation4], 128, 128, 8
    $region5: #{tpu_custom_call.1} parent=1 // pred_fallthru
      _
    // Predicated region
    $region6: #{tpu_custom_call.1} parent=1 // pred_check
      _
    $region7: #{tpu_custom_call.1} parent=1 // pred_check_branch
      %29 = sbr.rel (0) target = $region9
    $region8: #{tpu_custom_call.1} parent=1 // pred_region
      _
    $region9: #{tpu_custom_call.1} parent=1 // pred_fallthru
      _
    // Predicated region
    $region10: #{tpu_custom_call.1} parent=1 // pred_check
      _
    $region11: #{tpu_custom_call.1} parent=1 // pred_check_branch
      %31 = sbr.rel (0) target = $region13
    $region12: #{tpu_custom_call.1} parent=1 // pred_region
      _
    $region13: #{tpu_custom_call.1} parent=1 // pred_fallthru
      _
    // Predicated region
    $region14: #{tpu_custom_call.1} parent=1 // pred_check
      _
    $region15: #{tpu_custom_call.1} parent=1 // pred_check_branch
      %33 = sbr.rel (0) target = $region17
    $region16: #{tpu_custom_call.1} parent=1 // pred_region
      _
    $region17: #{tpu_custom_call.1} parent=1 // pred_fallthru
      _
    // Predicated region
    $region18: #{tpu_custom_call.1} parent=1 // pred_check
      _
    $region19: #{tpu_custom_call.1} parent=1 // pred_check_branch
      %35 = sbr.rel (0) target = $region21
    $region20: #{tpu_custom_call.1} parent=1 // pred_region
      _
    $region21: #{tpu_custom_call.1} parent=1 // pred_fallthru
      _
    // Predicated region
    $region22: #{tpu_custom_call.1} parent=1 // pred_check
      _
    $region23: #{tpu_custom_call.1} parent=1 // pred_check_branch
      %37 = sbr.rel (0) target = $region25
    $region24: #{tpu_custom_call.1} parent=1 // pred_region
      _
    $region25: #{tpu_custom_call.1} parent=1 // pred_fallthru
      _
    // Predicated region
    $region26: #{tpu_custom_call.1} parent=1 // pred_check
      _
    $region27: #{tpu_custom_call.1} parent=1 // pred_check_branch
      %39 = sbr.rel (0) target = $region29
    $region28: #{tpu_custom_call.1} parent=1 // pred_region
      %41 = vsyncadd [#allocation7], 0
      %s42 = sshll.u32 %s6, 4
      %s43 = int_to_ptr.hbm [resolvable:$true] %s42
      %s44 = sshll.u32 [#allocation6], 4
      %s45 = int_to_ptr.vmem [resolvable:$true] %s44
      %50 = dma.hbm_to_vmem [thread:$0]  %s43, 2048, %s45, [#allocation7], 128, 128, 8
    $region29: #{tpu_custom_call.1} parent=1 // pred_fallthru
      _
    // Predicated region
    $region30: #{tpu_custom_call.1} parent=1 // pred_check
      _
    $region31: #{tpu_custom_call.1} parent=1 // pred_check_branch
      %52 = sbr.rel (0) target = $region33
    $region32: #{tpu_custom_call.1} parent=1 // pred_region
      %54 = dma.done [#allocation4], 512
    $region33: #{tpu_custom_call.1} parent=1 // pred_fallthru
      _
    // Predicated region
    $region34: #{tpu_custom_call.1} parent=1 // pred_check
      _
    $region35: #{tpu_custom_call.1} parent=1 // pred_check_branch
      %56 = sbr.rel (0) target = $region37
    $region36: #{tpu_custom_call.1} parent=1 // pred_region
      %58 = dma.done [#allocation7], 2048
    $region37: #{tpu_custom_call.1} parent=1 // pred_fallthru
      _
    %p59 = scmp.eq.s32.totalorder 0, 0
    // Predicated region
    $region38: #{tpu_custom_call.1} parent=1 // pred_check
      %p60 = pneg %p59
    $region39: #{tpu_custom_call.1} parent=1 // pred_check_branch
      %62 = sbr.rel (%p60) target = $region41
    $region40: #{tpu_custom_call.1} parent=1 // pred_region
      %63 = vst [vmem:[#allocation2] sm:$0xff] 0.0
      %64 = vst [vmem:[#allocation2 + $0x8] sm:$0xff] 0.0
      %65 = vst [vmem:[#allocation2 + $0x10] sm:$0xff] 0.0
      %66 = vst [vmem:[#allocation2 + $0x18] sm:$0xff] 0.0
      %67 = vst [vmem:[#allocation2 + $0x20] sm:$0xff] 0.0
      %68 = vst [vmem:[#allocation2 + $0x28] sm:$0xff] 0.0
      %69 = vst [vmem:[#allocation2 + $0x30] sm:$0xff] 0.0
      %70 = vst [vmem:[#allocation2 + $0x38] sm:$0xff] 0.0
      %71 = vst [vmem:[#allocation2 + $0x40] sm:$0xff] 0.0
      %72 = vst [vmem:[#allocation2 + $0x48] sm:$0xff] 0.0
      %73 = vst [vmem:[#allocation2 + $0x50] sm:$0xff] 0.0
      %74 = vst [vmem:[#allocation2 + $0x58] sm:$0xff] 0.0
      %75 = vst [vmem:[#allocation2 + $0x60] sm:$0xff] 0.0
      %76 = vst [vmem:[#allocation2 + $0x68] sm:$0xff] 0.0
      %77 = vst [vmem:[#allocation2 + $0x70] sm:$0xff] 0.0
      %78 = vst [vmem:[#allocation2 + $0x78] sm:$0xff] 0.0
    $region41: #{tpu_custom_call.1} parent=1 // pred_fallthru
      _
    %v79 = vld [vmem:[#allocation3] sm:$0xff]
    %v80 = vld [vmem:[#allocation3 + $0x8] sm:$0xff]
    %v81 = vld [vmem:[#allocation3 + $0x10] sm:$0xff]
    %v82 = vld [vmem:[#allocation3 + $0x18] sm:$0xff]
    %v83 = vunpack.c.0.s8 %v79
    %v84 = vunpack.c.1.s8 %v79
    %v85 = vunpack.c.2.s8 %v79
    %v86 = vunpack.c.3.s8 %v79
    %v87 = vunpack.c.0.s8 %v80
    %v88 = vunpack.c.1.s8 %v80
    %v89 = vunpack.c.2.s8 %v80
    %v90 = vunpack.c.3.s8 %v80
    %v91 = vunpack.c.0.s8 %v81
    %v92 = vunpack.c.1.s8 %v81
    %v93 = vunpack.c.2.s8 %v81
    %v94 = vunpack.c.3.s8 %v81
    %v95 = vunpack.c.0.s8 %v82
    %v96 = vunpack.c.1.s8 %v82
    %v97 = vunpack.c.2.s8 %v82
    %v98 = vunpack.c.3.s8 %v82
    %v99 = vcvt.s32.f32 %v83
    %v100 = vcvt.s32.f32 %v84
    %v101 = vcvt.s32.f32 %v85
    %v102 = vcvt.s32.f32 %v86
    %v103 = vcvt.s32.f32 %v87
    %v104 = vcvt.s32.f32 %v88
    %v105 = vcvt.s32.f32 %v89
    %v106 = vcvt.s32.f32 %v90
    %v107 = vcvt.s32.f32 %v91
    %v108 = vcvt.s32.f32 %v92
    %v109 = vcvt.s32.f32 %v93
    %v110 = vcvt.s32.f32 %v94
    %v111 = vcvt.s32.f32 %v95
    %v112 = vcvt.s32.f32 %v96
    %v113 = vcvt.s32.f32 %v97
    %v114 = vcvt.s32.f32 %v98
    %v115 = vld [vmem:[%s2] sm:$0xff]
    %v116 = vld [vmem:[%s2 + $0x8] sm:$0xff]
    %v117 = vld [vmem:[%s2 + $0x10] sm:$0xff]
    %v118 = vld [vmem:[%s2 + $0x18] sm:$0xff]
    %v119 = vld [vmem:[%s2 + $0x20] sm:$0xff]
    %v120 = vld [vmem:[%s2 + $0x28] sm:$0xff]
    %v121 = vld [vmem:[%s2 + $0x30] sm:$0xff]
    %v122 = vld [vmem:[%s2 + $0x38] sm:$0xff]
    %v123 = vld [vmem:[%s2 + $0x40] sm:$0xff]
    %v124 = vld [vmem:[%s2 + $0x48] sm:$0xff]
    %v125 = vld [vmem:[%s2 + $0x50] sm:$0xff]
    %v126 = vld [vmem:[%s2 + $0x58] sm:$0xff]
    %v127 = vld [vmem:[%s2 + $0x60] sm:$0xff]
    %v128 = vld [vmem:[%s2 + $0x68] sm:$0xff]
    %v129 = vld [vmem:[%s2 + $0x70] sm:$0xff]
    %v130 = vld [vmem:[%s2 + $0x78] sm:$0xff]
    %v131 = vld [vmem:[%s1] sm:$0xff]
    %v132 = vld [vmem:[%s1 + $0x8] sm:$0xff]
    %v133 = vld [vmem:[%s1 + $0x10] sm:$0xff]
    %v134 = vld [vmem:[%s1 + $0x18] sm:$0xff]
    %v135 = vld [vmem:[%s1 + $0x20] sm:$0xff]
    %v136 = vld [vmem:[%s1 + $0x28] sm:$0xff]
    %v137 = vld [vmem:[%s1 + $0x30] sm:$0xff]
    %v138 = vld [vmem:[%s1 + $0x38] sm:$0xff]
    %v139 = vld [vmem:[%s1 + $0x40] sm:$0xff]
    %v140 = vld [vmem:[%s1 + $0x48] sm:$0xff]
    %v141 = vld [vmem:[%s1 + $0x50] sm:$0xff]
    %v142 = vld [vmem:[%s1 + $0x58] sm:$0xff]
    %v143 = vld [vmem:[%s1 + $0x60] sm:$0xff]
    %v144 = vld [vmem:[%s1 + $0x68] sm:$0xff]
    %v145 = vld [vmem:[%s1 + $0x70] sm:$0xff]
    %v146 = vld [vmem:[%s1 + $0x78] sm:$0xff]
    %148 = vset.pattern.permute.xlu0 0
    %149 = vperm.xlu0 %148, %v115
    %v150 = vpop.permute.xlu0 %149
    %153 = vset.pattern.permute.xlu0 0
    %154 = vperm.xlu0 %153, %v116
    %v155 = vpop.permute.xlu0 %154
    %158 = vset.pattern.permute.xlu0 0
    %159 = vperm.xlu0 %158, %v117
    %v160 = vpop.permute.xlu0 %159
    %163 = vset.pattern.permute.xlu0 0
    %164 = vperm.xlu0 %163, %v118
    %v165 = vpop.permute.xlu0 %164
    %168 = vset.pattern.permute.xlu0 0
    %169 = vperm.xlu0 %168, %v119
    %v170 = vpop.permute.xlu0 %169
    %173 = vset.pattern.permute.xlu0 0
    %174 = vperm.xlu0 %173, %v120
    %v175 = vpop.permute.xlu0 %174
    %178 = vset.pattern.permute.xlu0 0
    %179 = vperm.xlu0 %178, %v121
    %v180 = vpop.permute.xlu0 %179
    %183 = vset.pattern.permute.xlu0 0
    %184 = vperm.xlu0 %183, %v122
    %v185 = vpop.permute.xlu0 %184
    %188 = vset.pattern.permute.xlu0 0
    %189 = vperm.xlu0 %188, %v123
    %v190 = vpop.permute.xlu0 %189
    %193 = vset.pattern.permute.xlu0 0
    %194 = vperm.xlu0 %193, %v124
    %v195 = vpop.permute.xlu0 %194
    %198 = vset.pattern.permute.xlu0 0
    %199 = vperm.xlu0 %198, %v125
    %v200 = vpop.permute.xlu0 %199
    %203 = vset.pattern.permute.xlu0 0
    %204 = vperm.xlu0 %203, %v126
    %v205 = vpop.permute.xlu0 %204
    %208 = vset.pattern.permute.xlu0 0
    %209 = vperm.xlu0 %208, %v127
    %v210 = vpop.permute.xlu0 %209
    %213 = vset.pattern.permute.xlu0 0
    %214 = vperm.xlu0 %213, %v128
    %v215 = vpop.permute.xlu0 %214
    %218 = vset.pattern.permute.xlu0 0
    %219 = vperm.xlu0 %218, %v129
    %v220 = vpop.permute.xlu0 %219
    %223 = vset.pattern.permute.xlu0 0
    %224 = vperm.xlu0 %223, %v130
    %v225 = vpop.permute.xlu0 %224
    %v227 = vmul.f32 %v150, %v131
    %v228 = vmul.f32 %v155, %v132
    %v229 = vmul.f32 %v160, %v133
    %v230 = vmul.f32 %v165, %v134
    %v231 = vmul.f32 %v170, %v135
    %v232 = vmul.f32 %v175, %v136
    %v233 = vmul.f32 %v180, %v137
    %v234 = vmul.f32 %v185, %v138
    %v235 = vmul.f32 %v190, %v139
    %v236 = vmul.f32 %v195, %v140
    %v237 = vmul.f32 %v200, %v141
    %v238 = vmul.f32 %v205, %v142
    %v239 = vmul.f32 %v210, %v143
    %v240 = vmul.f32 %v215, %v144
    %v241 = vmul.f32 %v220, %v145
    %v242 = vmul.f32 %v225, %v146
    %v243 = vld [vmem:[#allocation2] sm:$0xff]
    %v244 = vld [vmem:[#allocation2 + $0x8] sm:$0xff]
    %v245 = vld [vmem:[#allocation2 + $0x10] sm:$0xff]
    %v246 = vld [vmem:[#allocation2 + $0x18] sm:$0xff]
    %v247 = vld [vmem:[#allocation2 + $0x20] sm:$0xff]
    %v248 = vld [vmem:[#allocation2 + $0x28] sm:$0xff]
    %v249 = vld [vmem:[#allocation2 + $0x30] sm:$0xff]
    %v250 = vld [vmem:[#allocation2 + $0x38] sm:$0xff]
    %v251 = vld [vmem:[#allocation2 + $0x40] sm:$0xff]
    %v252 = vld [vmem:[#allocation2 + $0x48] sm:$0xff]
    %v253 = vld [vmem:[#allocation2 + $0x50] sm:$0xff]
    %v254 = vld [vmem:[#allocation2 + $0x58] sm:$0xff]
    %v255 = vld [vmem:[#allocation2 + $0x60] sm:$0xff]
    %v256 = vld [vmem:[#allocation2 + $0x68] sm:$0xff]
    %v257 = vld [vmem:[#allocation2 + $0x70] sm:$0xff]
    %v258 = vld [vmem:[#allocation2 + $0x78] sm:$0xff]
    %259 = vmatpush.msra.mxu0 %v242
    %260 = vmatpush.msra.mxu0 %v241
    %261 = vmatpush.msra.mxu0 %v240
    %262 = vmatpush.msra.mxu0 %v239
    %263 = vmatpush.msra.mxu0 %v238
    %264 = vmatpush.msra.mxu0 %v237
    %265 = vmatpush.msra.mxu0 %v236
    %266 = vmatpush.msra.mxu0 %v235
    %267 = vmatpush.msra.mxu0 %v234
    %268 = vmatpush.msra.mxu0 %v233
    %269 = vmatpush.msra.mxu0 %v232
    %270 = vmatpush.msra.mxu0 %v231
    %271 = vmatpush.msra.mxu0 %v230
    %272 = vmatpush.msra.mxu0 %v229
    %273 = vmatpush.msra.mxu0 %v228
    %274 = vmatpush.msra.mxu0 %v227
    %275 = vmatmul.f32.gmra.mxu0 %v99
    %v276 = vpop.f32.mrf.mxu0
    %v277 = vadd.f32 0.0, %v276
    %278 = vmatmul.f32.gmra.mxu0 %v100
    %v279 = vpop.f32.mrf.mxu0
    %v280 = vadd.f32 0.0, %v279
    %281 = vmatmul.f32.gmra.mxu0 %v101
    %v282 = vpop.f32.mrf.mxu0
    %v283 = vadd.f32 0.0, %v282
    %284 = vmatmul.f32.gmra.mxu0 %v102
    %v285 = vpop.f32.mrf.mxu0
    %v286 = vadd.f32 0.0, %v285
    %287 = vmatmul.f32.gmra.mxu0 %v103
    %v288 = vpop.f32.mrf.mxu0
    %v289 = vadd.f32 0.0, %v288
    %290 = vmatmul.f32.gmra.mxu0 %v104
    %v291 = vpop.f32.mrf.mxu0
    %v292 = vadd.f32 0.0, %v291
    %293 = vmatmul.f32.gmra.mxu0 %v105
    %v294 = vpop.f32.mrf.mxu0
    %v295 = vadd.f32 0.0, %v294
    %296 = vmatmul.f32.gmra.mxu0 %v106
    %v297 = vpop.f32.mrf.mxu0
    %v298 = vadd.f32 0.0, %v297
    %299 = vmatmul.f32.gmra.mxu0 %v107
    %v300 = vpop.f32.mrf.mxu0
    %v301 = vadd.f32 0.0, %v300
    %302 = vmatmul.f32.gmra.mxu0 %v108
    %v303 = vpop.f32.mrf.mxu0
    %v304 = vadd.f32 0.0, %v303
    %305 = vmatmul.f32.gmra.mxu0 %v109
    %v306 = vpop.f32.mrf.mxu0
    %v307 = vadd.f32 0.0, %v306
    %308 = vmatmul.f32.gmra.mxu0 %v110
    %v309 = vpop.f32.mrf.mxu0
    %v310 = vadd.f32 0.0, %v309
    %311 = vmatmul.f32.gmra.mxu0 %v111
    %v312 = vpop.f32.mrf.mxu0
    %v313 = vadd.f32 0.0, %v312
    %314 = vmatmul.f32.gmra.mxu0 %v112
    %v315 = vpop.f32.mrf.mxu0
    %v316 = vadd.f32 0.0, %v315
    %317 = vmatmul.f32.gmra.mxu0 %v113
    %v318 = vpop.f32.mrf.mxu0
    %v319 = vadd.f32 0.0, %v318
    %320 = vmatmul.f32.gmra.mxu0 %v114
    %v321 = vpop.f32.mrf.mxu0
    %v322 = vadd.f32 0.0, %v321
    %323 = vdwg.mxu0
    %v324 = vadd.f32 %v243, %v277
    %v325 = vadd.f32 %v244, %v280
    %v326 = vadd.f32 %v245, %v283
    %v327 = vadd.f32 %v246, %v286
    %v328 = vadd.f32 %v247, %v289
    %v329 = vadd.f32 %v248, %v292
    %v330 = vadd.f32 %v249, %v295
    %v331 = vadd.f32 %v250, %v298
    %v332 = vadd.f32 %v251, %v301
    %v333 = vadd.f32 %v252, %v304
    %v334 = vadd.f32 %v253, %v307
    %v335 = vadd.f32 %v254, %v310
    %v336 = vadd.f32 %v255, %v313
    %v337 = vadd.f32 %v256, %v316
    %v338 = vadd.f32 %v257, %v319
    %v339 = vadd.f32 %v258, %v322
    %340 = vst [vmem:[#allocation2] sm:$0xff] %v324
    %341 = vst [vmem:[#allocation2 + $0x8] sm:$0xff] %v325
    %342 = vst [vmem:[#allocation2 + $0x10] sm:$0xff] %v326
    %343 = vst [vmem:[#allocation2 + $0x18] sm:$0xff] %v327
    %344 = vst [vmem:[#allocation2 + $0x20] sm:$0xff] %v328
    %345 = vst [vmem:[#allocation2 + $0x28] sm:$0xff] %v329
    %346 = vst [vmem:[#allocation2 + $0x30] sm:$0xff] %v330
    %347 = vst [vmem:[#allocation2 + $0x38] sm:$0xff] %v331
    %348 = vst [vmem:[#allocation2 + $0x40] sm:$0xff] %v332
    %349 = vst [vmem:[#allocation2 + $0x48] sm:$0xff] %v333
    %350 = vst [vmem:[#allocation2 + $0x50] sm:$0xff] %v334
    %351 = vst [vmem:[#allocation2 + $0x58] sm:$0xff] %v335
    %352 = vst [vmem:[#allocation2 + $0x60] sm:$0xff] %v336
    %353 = vst [vmem:[#allocation2 + $0x68] sm:$0xff] %v337
    %354 = vst [vmem:[#allocation2 + $0x70] sm:$0xff] %v338
    %355 = vst [vmem:[#allocation2 + $0x78] sm:$0xff] %v339
    // Predicated region
    $region42: #{tpu_custom_call.1} parent=1 // pred_check
      %p356 = pneg %p59
    $region43: #{tpu_custom_call.1} parent=1 // pred_check_branch
      %358 = sbr.rel (%p356) target = $region45
    $region44: #{tpu_custom_call.1} parent=1 // pred_region
      %v359 = vld [vmem:[%s3] sm:$0xff]
      %v360 = vld [vmem:[%s3 + $0x8] sm:$0xff]
      %v361 = vld [vmem:[%s3 + $0x10] sm:$0xff]
      %v362 = vld [vmem:[%s3 + $0x18] sm:$0xff]
      %v363 = vld [vmem:[%s3 + $0x20] sm:$0xff]
      %v364 = vld [vmem:[%s3 + $0x28] sm:$0xff]
      %v365 = vld [vmem:[%s3 + $0x30] sm:$0xff]
      %v366 = vld [vmem:[%s3 + $0x38] sm:$0xff]
      %v367 = vld [vmem:[%s3 + $0x40] sm:$0xff]
      %v368 = vld [vmem:[%s3 + $0x48] sm:$0xff]
      %v369 = vld [vmem:[%s3 + $0x50] sm:$0xff]
      %v370 = vld [vmem:[%s3 + $0x58] sm:$0xff]
      %v371 = vld [vmem:[%s3 + $0x60] sm:$0xff]
      %v372 = vld [vmem:[%s3 + $0x68] sm:$0xff]
      %v373 = vld [vmem:[%s3 + $0x70] sm:$0xff]
      %v374 = vld [vmem:[%s3 + $0x78] sm:$0xff]
      %v375 = vld [vmem:[#allocation2] sm:$0xff]
      %v376 = vld [vmem:[#allocation2 + $0x8] sm:$0xff]
      %v377 = vld [vmem:[#allocation2 + $0x10] sm:$0xff]
      %v378 = vld [vmem:[#allocation2 + $0x18] sm:$0xff]
      %v379 = vld [vmem:[#allocation2 + $0x20] sm:$0xff]
      %v380 = vld [vmem:[#allocation2 + $0x28] sm:$0xff]
      %v381 = vld [vmem:[#allocation2 + $0x30] sm:$0xff]
      %v382 = vld [vmem:[#allocation2 + $0x38] sm:$0xff]
      %v383 = vld [vmem:[#allocation2 + $0x40] sm:$0xff]
      %v384 = vld [vmem:[#allocation2 + $0x48] sm:$0xff]
      %v385 = vld [vmem:[#allocation2 + $0x50] sm:$0xff]
      %v386 = vld [vmem:[#allocation2 + $0x58] sm:$0xff]
      %v387 = vld [vmem:[#allocation2 + $0x60] sm:$0xff]
      %v388 = vld [vmem:[#allocation2 + $0x68] sm:$0xff]
      %v389 = vld [vmem:[#allocation2 + $0x70] sm:$0xff]
      %v390 = vld [vmem:[#allocation2 + $0x78] sm:$0xff]
      %392 = vset.pattern.permute.xlu0 0
      %393 = vperm.xlu0 %392, %v359
      %v394 = vpop.permute.xlu0 %393
      %397 = vset.pattern.permute.xlu0 0
      %398 = vperm.xlu0 %397, %v360
      %v399 = vpop.permute.xlu0 %398
      %402 = vset.pattern.permute.xlu0 0
      %403 = vperm.xlu0 %402, %v361
      %v404 = vpop.permute.xlu0 %403
      %407 = vset.pattern.permute.xlu0 0
      %408 = vperm.xlu0 %407, %v362
      %v409 = vpop.permute.xlu0 %408
      %412 = vset.pattern.permute.xlu0 0
      %413 = vperm.xlu0 %412, %v363
      %v414 = vpop.permute.xlu0 %413
      %417 = vset.pattern.permute.xlu0 0
      %418 = vperm.xlu0 %417, %v364
      %v419 = vpop.permute.xlu0 %418
      %422 = vset.pattern.permute.xlu0 0
      %423 = vperm.xlu0 %422, %v365
      %v424 = vpop.permute.xlu0 %423
      %427 = vset.pattern.permute.xlu0 0
      %428 = vperm.xlu0 %427, %v366
      %v429 = vpop.permute.xlu0 %428
      %432 = vset.pattern.permute.xlu0 0
      %433 = vperm.xlu0 %432, %v367
      %v434 = vpop.permute.xlu0 %433
      %437 = vset.pattern.permute.xlu0 0
      %438 = vperm.xlu0 %437, %v368
      %v439 = vpop.permute.xlu0 %438
      %442 = vset.pattern.permute.xlu0 0
      %443 = vperm.xlu0 %442, %v369
      %v444 = vpop.permute.xlu0 %443
      %447 = vset.pattern.permute.xlu0 0
      %448 = vperm.xlu0 %447, %v370
      %v449 = vpop.permute.xlu0 %448
      %452 = vset.pattern.permute.xlu0 0
      %453 = vperm.xlu0 %452, %v371
      %v454 = vpop.permute.xlu0 %453
      %457 = vset.pattern.permute.xlu0 0
      %458 = vperm.xlu0 %457, %v372
      %v459 = vpop.permute.xlu0 %458
      %462 = vset.pattern.permute.xlu0 0
      %463 = vperm.xlu0 %462, %v373
      %v464 = vpop.permute.xlu0 %463
      %467 = vset.pattern.permute.xlu0 0
      %468 = vperm.xlu0 %467, %v374
      %v469 = vpop.permute.xlu0 %468
      %v471 = vmul.f32 %v394, %v375
      %v472 = vmul.f32 %v399, %v376
      %v473 = vmul.f32 %v404, %v377
      %v474 = vmul.f32 %v409, %v378
      %v475 = vmul.f32 %v414, %v379
      %v476 = vmul.f32 %v419, %v380
      %v477 = vmul.f32 %v424, %v381
      %v478 = vmul.f32 %v429, %v382
      %v479 = vmul.f32 %v434, %v383
      %v480 = vmul.f32 %v439, %v384
      %v481 = vmul.f32 %v444, %v385
      %v482 = vmul.f32 %v449, %v386
      %v483 = vmul.f32 %v454, %v387
      %v484 = vmul.f32 %v459, %v388
      %v485 = vmul.f32 %v464, %v389
      %v486 = vmul.f32 %v469, %v390
      %v487 = vld [vmem:[%s5] sm:$0xff]
      %v488 = vld [vmem:[%s5 + $0x8] sm:$0xff]
      %v489 = vld [vmem:[%s5 + $0x10] sm:$0xff]
      %v490 = vld [vmem:[%s5 + $0x18] sm:$0xff]
      %v491 = vld [vmem:[%s5 + $0x20] sm:$0xff]
      %v492 = vld [vmem:[%s5 + $0x28] sm:$0xff]
      %v493 = vld [vmem:[%s5 + $0x30] sm:$0xff]
      %v494 = vld [vmem:[%s5 + $0x38] sm:$0xff]
      %v495 = vld [vmem:[%s5 + $0x40] sm:$0xff]
      %v496 = vld [vmem:[%s5 + $0x48] sm:$0xff]
      %v497 = vld [vmem:[%s5 + $0x50] sm:$0xff]
      %v498 = vld [vmem:[%s5 + $0x58] sm:$0xff]
      %v499 = vld [vmem:[%s5 + $0x60] sm:$0xff]
      %v500 = vld [vmem:[%s5 + $0x68] sm:$0xff]
      %v501 = vld [vmem:[%s5 + $0x70] sm:$0xff]
      %v502 = vld [vmem:[%s5 + $0x78] sm:$0xff]
      %v503 = vld [vmem:[%s4] sm:$0x1]
      %v505 = vperm.slane %v503, 0
      %507 = vmatpush.msra.mxu0 %v502
      %508 = vmatpush.msra.mxu0 %v501
      %509 = vmatpush.msra.mxu0 %v500
      %510 = vmatpush.msra.mxu0 %v499
      %511 = vmatpush.msra.mxu0 %v498
      %512 = vmatpush.msra.mxu0 %v497
      %513 = vmatpush.msra.mxu0 %v496
      %514 = vmatpush.msra.mxu0 %v495
      %515 = vmatpush.msra.mxu0 %v494
      %516 = vmatpush.msra.mxu0 %v493
      %517 = vmatpush.msra.mxu0 %v492
      %518 = vmatpush.msra.mxu0 %v491
      %519 = vmatpush.msra.mxu0 %v490
      %520 = vmatpush.msra.mxu0 %v489
      %521 = vmatpush.msra.mxu0 %v488
      %522 = vmatpush.msra.mxu0 %v487
      %523 = vmatmul.f32.gmra.mxu0 %v471
      %v524 = vpop.f32.mrf.mxu0
      %v525 = vadd.f32 %v505, %v524
      %526 = vmatmul.f32.gmra.mxu0 %v472
      %v527 = vpop.f32.mrf.mxu0
      %v528 = vadd.f32 %v505, %v527
      %529 = vmatmul.f32.gmra.mxu0 %v473
      %v530 = vpop.f32.mrf.mxu0
      %v531 = vadd.f32 %v505, %v530
      %532 = vmatmul.f32.gmra.mxu0 %v474
      %v533 = vpop.f32.mrf.mxu0
      %v534 = vadd.f32 %v505, %v533
      %535 = vmatmul.f32.gmra.mxu0 %v475
      %v536 = vpop.f32.mrf.mxu0
      %v537 = vadd.f32 %v505, %v536
      %538 = vmatmul.f32.gmra.mxu0 %v476
      %v539 = vpop.f32.mrf.mxu0
      %v540 = vadd.f32 %v505, %v539
      %541 = vmatmul.f32.gmra.mxu0 %v477
      %v542 = vpop.f32.mrf.mxu0
      %v543 = vadd.f32 %v505, %v542
      %544 = vmatmul.f32.gmra.mxu0 %v478
      %v545 = vpop.f32.mrf.mxu0
      %v546 = vadd.f32 %v505, %v545
      %547 = vmatmul.f32.gmra.mxu0 %v479
      %v548 = vpop.f32.mrf.mxu0
      %v549 = vadd.f32 %v505, %v548
      %550 = vmatmul.f32.gmra.mxu0 %v480
      %v551 = vpop.f32.mrf.mxu0
      %v552 = vadd.f32 %v505, %v551
      %553 = vmatmul.f32.gmra.mxu0 %v481
      %v554 = vpop.f32.mrf.mxu0
      %v555 = vadd.f32 %v505, %v554
      %556 = vmatmul.f32.gmra.mxu0 %v482
      %v557 = vpop.f32.mrf.mxu0
      %v558 = vadd.f32 %v505, %v557
      %559 = vmatmul.f32.gmra.mxu0 %v483
      %v560 = vpop.f32.mrf.mxu0
      %v561 = vadd.f32 %v505, %v560
      %562 = vmatmul.f32.gmra.mxu0 %v484
      %v563 = vpop.f32.mrf.mxu0
      %v564 = vadd.f32 %v505, %v563
      %565 = vmatmul.f32.gmra.mxu0 %v485
      %v566 = vpop.f32.mrf.mxu0
      %v567 = vadd.f32 %v505, %v566
      %568 = vmatmul.f32.gmra.mxu0 %v486
      %v569 = vpop.f32.mrf.mxu0
      %v570 = vadd.f32 %v505, %v569
      %571 = vdwg.mxu0
      %v572 = vmax.f32 %v525, 0.0
      %v573 = vmax.f32 %v528, 0.0
      %v574 = vmax.f32 %v531, 0.0
      %v575 = vmax.f32 %v534, 0.0
      %v576 = vmax.f32 %v537, 0.0
      %v577 = vmax.f32 %v540, 0.0
      %v578 = vmax.f32 %v543, 0.0
      %v579 = vmax.f32 %v546, 0.0
      %v580 = vmax.f32 %v549, 0.0
      %v581 = vmax.f32 %v552, 0.0
      %v582 = vmax.f32 %v555, 0.0
      %v583 = vmax.f32 %v558, 0.0
      %v584 = vmax.f32 %v561, 0.0
      %v585 = vmax.f32 %v564, 0.0
      %v586 = vmax.f32 %v567, 0.0
      %v587 = vmax.f32 %v570, 0.0
      %v588 = vmul.f32 %v394, %v572
      %v589 = vmul.f32 %v399, %v573
      %v590 = vmul.f32 %v404, %v574
      %v591 = vmul.f32 %v409, %v575
      %v592 = vmul.f32 %v414, %v576
      %v593 = vmul.f32 %v419, %v577
      %v594 = vmul.f32 %v424, %v578
      %v595 = vmul.f32 %v429, %v579
      %v596 = vmul.f32 %v434, %v580
      %v597 = vmul.f32 %v439, %v581
      %v598 = vmul.f32 %v444, %v582
      %v599 = vmul.f32 %v449, %v583
      %v600 = vmul.f32 %v454, %v584
      %v601 = vmul.f32 %v459, %v585
      %v602 = vmul.f32 %v464, %v586
      %v603 = vmul.f32 %v469, %v587
      %v604 = vld [vmem:[#allocation6] sm:$0xff]
      %v605 = vld [vmem:[#allocation6 + $0x8] sm:$0xff]
      %v606 = vld [vmem:[#allocation6 + $0x10] sm:$0xff]
      %v607 = vld [vmem:[#allocation6 + $0x18] sm:$0xff]
      %v608 = vld [vmem:[#allocation6 + $0x20] sm:$0xff]
      %v609 = vld [vmem:[#allocation6 + $0x28] sm:$0xff]
      %v610 = vld [vmem:[#allocation6 + $0x30] sm:$0xff]
      %v611 = vld [vmem:[#allocation6 + $0x38] sm:$0xff]
      %v612 = vld [vmem:[#allocation6 + $0x40] sm:$0xff]
      %v613 = vld [vmem:[#allocation6 + $0x48] sm:$0xff]
      %v614 = vld [vmem:[#allocation6 + $0x50] sm:$0xff]
      %v615 = vld [vmem:[#allocation6 + $0x58] sm:$0xff]
      %v616 = vld [vmem:[#allocation6 + $0x60] sm:$0xff]
      %v617 = vld [vmem:[#allocation6 + $0x68] sm:$0xff]
      %v618 = vld [vmem:[#allocation6 + $0x70] sm:$0xff]
      %v619 = vld [vmem:[#allocation6 + $0x78] sm:$0xff]
      %620 = vmatpush.msra.mxu0 %v619
      %621 = vmatpush.msra.mxu0 %v618
      %622 = vmatpush.msra.mxu0 %v617
      %623 = vmatpush.msra.mxu0 %v616
      %624 = vmatpush.msra.mxu0 %v615
      %625 = vmatpush.msra.mxu0 %v614
      %626 = vmatpush.msra.mxu0 %v613
      %627 = vmatpush.msra.mxu0 %v612
      %628 = vmatpush.msra.mxu0 %v611
      %629 = vmatpush.msra.mxu0 %v610
      %630 = vmatpush.msra.mxu0 %v609
      %631 = vmatpush.msra.mxu0 %v608
      %632 = vmatpush.msra.mxu0 %v607
      %633 = vmatpush.msra.mxu0 %v606
      %634 = vmatpush.msra.mxu0 %v605
      %635 = vmatpush.msra.mxu0 %v604
      %636 = vmatmul.f32.gmra.mxu0 %v588
      %v637 = vpop.f32.mrf.mxu0
      %v638 = vadd.f32 0.0, %v637
      %639 = vmatmul.f32.gmra.mxu0 %v589
      %v640 = vpop.f32.mrf.mxu0
      %v641 = vadd.f32 0.0, %v640
      %642 = vmatmul.f32.gmra.mxu0 %v590
      %v643 = vpop.f32.mrf.mxu0
      %v644 = vadd.f32 0.0, %v643
      %645 = vmatmul.f32.gmra.mxu0 %v591
      %v646 = vpop.f32.mrf.mxu0
      %v647 = vadd.f32 0.0, %v646
      %648 = vmatmul.f32.gmra.mxu0 %v592
      %v649 = vpop.f32.mrf.mxu0
      %v650 = vadd.f32 0.0, %v649
      %651 = vmatmul.f32.gmra.mxu0 %v593
      %v652 = vpop.f32.mrf.mxu0
      %v653 = vadd.f32 0.0, %v652
      %654 = vmatmul.f32.gmra.mxu0 %v594
      %v655 = vpop.f32.mrf.mxu0
      %v656 = vadd.f32 0.0, %v655
      %657 = vmatmul.f32.gmra.mxu0 %v595
      %v658 = vpop.f32.mrf.mxu0
      %v659 = vadd.f32 0.0, %v658
      %660 = vmatmul.f32.gmra.mxu0 %v596
      %v661 = vpop.f32.mrf.mxu0
      %v662 = vadd.f32 0.0, %v661
      %663 = vmatmul.f32.gmra.mxu0 %v597
      %v664 = vpop.f32.mrf.mxu0
      %v665 = vadd.f32 0.0, %v664
      %666 = vmatmul.f32.gmra.mxu0 %v598
      %v667 = vpop.f32.mrf.mxu0
      %v668 = vadd.f32 0.0, %v667
      %669 = vmatmul.f32.gmra.mxu0 %v599
      %v670 = vpop.f32.mrf.mxu0
      %v671 = vadd.f32 0.0, %v670
      %672 = vmatmul.f32.gmra.mxu0 %v600
      %v673 = vpop.f32.mrf.mxu0
      %v674 = vadd.f32 0.0, %v673
      %675 = vmatmul.f32.gmra.mxu0 %v601
      %v676 = vpop.f32.mrf.mxu0
      %v677 = vadd.f32 0.0, %v676
      %678 = vmatmul.f32.gmra.mxu0 %v602
      %v679 = vpop.f32.mrf.mxu0
      %v680 = vadd.f32 0.0, %v679
      %681 = vmatmul.f32.gmra.mxu0 %v603
      %v682 = vpop.f32.mrf.mxu0
      %v683 = vadd.f32 0.0, %v682
      %684 = vdwg.mxu0
      %685 = vst [vmem:[#allocation8] sm:$0xff] %v638
      %686 = vst [vmem:[#allocation8 + $0x8] sm:$0xff] %v641
      %687 = vst [vmem:[#allocation8 + $0x10] sm:$0xff] %v644
      %688 = vst [vmem:[#allocation8 + $0x18] sm:$0xff] %v647
      %689 = vst [vmem:[#allocation8 + $0x20] sm:$0xff] %v650
      %690 = vst [vmem:[#allocation8 + $0x28] sm:$0xff] %v653
      %691 = vst [vmem:[#allocation8 + $0x30] sm:$0xff] %v656
      %692 = vst [vmem:[#allocation8 + $0x38] sm:$0xff] %v659
      %693 = vst [vmem:[#allocation8 + $0x40] sm:$0xff] %v662
      %694 = vst [vmem:[#allocation8 + $0x48] sm:$0xff] %v665
      %695 = vst [vmem:[#allocation8 + $0x50] sm:$0xff] %v668
      %696 = vst [vmem:[#allocation8 + $0x58] sm:$0xff] %v671
      %697 = vst [vmem:[#allocation8 + $0x60] sm:$0xff] %v674
      %698 = vst [vmem:[#allocation8 + $0x68] sm:$0xff] %v677
      %699 = vst [vmem:[#allocation8 + $0x70] sm:$0xff] %v680
      %700 = vst [vmem:[#allocation8 + $0x78] sm:$0xff] %v683
    $region45: #{tpu_custom_call.1} parent=1 // pred_fallthru
      _
    // Predicated region
    $region46: #{tpu_custom_call.1} parent=1 // pred_check
      _
    $region47: #{tpu_custom_call.1} parent=1 // pred_check_branch
      %702 = sbr.rel (0) target = $region49
    $region48: #{tpu_custom_call.1} parent=1 // pred_region
      %704 = vsyncadd [#allocation5], 0
      %s705 = sshll.u32 [#allocation8], 4
      %s706 = int_to_ptr.vmem [resolvable:$true] %s705
      %s707 = sshll.u32 %s7, 4
      %s708 = int_to_ptr.hbm [resolvable:$true] %s707
      %713 = dma.vmem_to_hbm [thread:$0]  %s706, 2048, %s708, [#allocation5], 128, 128, 8
    $region49: #{tpu_custom_call.1} parent=1 // pred_fallthru
      _
    // Predicated region
    $region50: #{tpu_custom_call.1} parent=1 // pred_check
      _
    $region51: #{tpu_custom_call.1} parent=1 // pred_check_branch
      %715 = sbr.rel (0) target = $region53
    $region52: #{tpu_custom_call.1} parent=1 // pred_region
      %717 = dma.done [#allocation5], 2048
    $region53: #{tpu_custom_call.1} parent=1 // pred_fallthru
      _
    %718 = vsyncpa [#allocation4], 1
    %719 = vsyncpa [#allocation7], 1
    %720 = vsyncpa [#allocation5], 1

</llo_original>
